<compile_context>
chip_gen: v5e
topology: v5e:2x2
jax: 0.10.0
libtpu: 0.0.40
codegen_flags: <defaults>
</compile_context>

<pallas_src>
import functools

import numpy as np
import jax
import jax.numpy as jnp
from jax.experimental import pallas as pl
from jax.experimental.pallas import tpu as pltpu

LEAKY_SLOPE = 0.05   # GATLayer default alpha for LeakyReLU
NEG_BIG = -1e30      # finite "-inf" so exp(m_prev - m_new) is always well-defined


def _round_up(x, m):
    return ((x + m - 1) // m) * m


# ---------------------------------------------------------------------------
# Pass 1: z = x @ W (lane-padded, ones-column at column H) + per-node score halves
# ---------------------------------------------------------------------------
def project_kernel(x_ref, w_ref, a1_ref, a2_ref, b_ref,
                   z_ref, esrc_ref, edst_ref, *, h_dim):
    # (block_m, lane_w) f32; columns >= h_dim are zero because W was zero-padded.
    z = jnp.dot(x_ref[...], w_ref[...], preferred_element_type=jnp.float32)
    # Per-node halves of the concat-linear attention score as VPU lane reductions
    # (a width-1 MXU matmul would waste 127/128 output lanes).  a1/a2 are zero-padded so
    # the extra lanes contribute 0; the bias (SMEM scalar) is folded into e_src once.
    esrc_ref[...] = jnp.sum(z * a1_ref[...], axis=-1, keepdims=True) + b_ref[0, 0]
    edst_ref[...] = jnp.sum(z * a2_ref[...], axis=-1, keepdims=True)
    # Ones-column at h_dim: pass 2's single MXU matmul then also produces the softmax
    # denominator (rowsum).  Stored bf16 (halves HBM writeback + pass-2 VMEM footprint).
    col = jax.lax.broadcasted_iota(jnp.int32, z.shape, 1)
    z_ref[...] = jnp.where(col == h_dim, 1.0, z).astype(z_ref.dtype)


# ---------------------------------------------------------------------------
# Pass 2: flash-style streamed, masked, row-normalized aggregation
# ---------------------------------------------------------------------------
def gat_attn_kernel(adj_ref, z_ref, esrc_ref, edst_ref, out_ref, m_ref,
                    *, block_n, h_dim, z_resident):
    j = pl.program_id(1)

    @pl.when(j == 0)
    def _init():
        out_ref[...] = jnp.zeros_like(out_ref)
        m_ref[...] = jnp.full(m_ref.shape, NEG_BIG, dtype=m_ref.dtype)

    edge = adj_ref[...] != 0                               # int8 adjacency tile
    s = esrc_ref[...] + edst_ref[...]                      # (bm,1)+(1,bn) -> (bm,bn)
    s = jnp.where(s > 0, s, LEAKY_SLOPE * s)               # LeakyReLU(0.05)

    # Online running max per destination row (numerical robustness of exp).
    m_prev = m_ref[...]
    m_new = jnp.maximum(
        m_prev, jnp.max(jnp.where(edge, s, NEG_BIG), axis=1, keepdims=True))
    scale = jnp.exp(m_prev - m_new)                        # == 1 while a row is still empty
    p = jnp.where(edge, jnp.exp(s - m_new), 0.0)           # masked exp (select, no cast*mul)
    m_ref[...] = m_new

    if z_resident:                                         # static trace-time switch
        start = pl.multiple_of(j * block_n, block_n)
        zj = z_ref[pl.ds(start, block_n), :]
    else:
        zj = z_ref[...]

    # Lane-dense (block_m, lane_w) f32 accumulator.  z's column h_dim is the ones-column,
    # so this single bf16 MXU matmul also accumulates rowsum (f32 accumulation kept).
    out_ref[...] = out_ref[...] * scale + jnp.dot(
        p.astype(zj.dtype), zj, preferred_element_type=jnp.float32)

    @pl.when(j == pl.num_programs(1) - 1)
    def _finalize():
        acc = out_ref[...]
        col = jax.lax.broadcasted_iota(jnp.int32, acc.shape, 1)
        rs = jnp.sum(jnp.where(col == h_dim, acc, 0.0), axis=1, keepdims=True)
        inv = jnp.where(rs > 0, 1.0 / rs, 0.0)             # padded / neighbor-less rows -> 0
        # columns [0:h_dim): normalized output; col h_dim: rowsum; col h_dim+1: running max.
        # The latter two feed the wrapper's O(E) per-edge alpha reconstruction.
        out_ref[...] = jnp.where(col < h_dim, acc * inv,
                                 jnp.where(col == h_dim, rs, m_ref[...]))


def gat_forward_pallas(x, adj_dense, fc_weight, a_weight, a_bias,
                       *, block_m=256, block_n=512):
    """x: (N,F); adj_dense: (N,N) 0/1 mask (int8 preferred); fc_weight: (H,F);
    a_weight: (1,2H); a_bias: (1,).
    Returns (out (N,H), e_src (N,), e_dst (N,), rowsum (N,), rowmax (N,))."""
    x = x.astype(jnp.float32)
    N, F = x.shape
    H = fc_weight.shape[0]
    lane_w = max(128, _round_up(H + 2, 128))   # room for ones-column (H) and max (H+1)

    # Adapt tile sizes to small graphs; keep >= 2 destination-row blocks so both of a
    # v7x chip's TensorCores get work on the "parallel" row axis.
    n128 = _round_up(N, 128)
    block_n = max(128, min(block_n, n128))
    block_m = max(128, min(block_m, n128))
    if n128 // block_m < 2 and block_m > 128:
        block_m = max(128, n128 // 2)
    mult = int(np.lcm(block_m, block_n))
    n_pad = _round_up(N, mult)

    w = jnp.zeros((F, lane_w), jnp.float32).at[:, :H].set(fc_weight.T.astype(jnp.float32))
    a1 = jnp.zeros((1, lane_w), jnp.float32).at[:, :H].set(a_weight[:, :H].astype(jnp.float32))
    a2 = jnp.zeros((1, lane_w), jnp.float32).at[:, :H].set(a_weight[:, H:].astype(jnp.float32))
    b = a_bias.reshape(1, 1).astype(jnp.float32)           # SMEM scalar

    # Cast the adjacency to int8 BEFORE padding so the (N,N) pad touches 1 byte/element.
    # TODO(synk): for v5e-class HBM, bit-pack the adjacency to 1 bit/edge and expand in-kernel.
    adj_i8 = adj_dense if adj_dense.dtype == jnp.int8 else adj_dense.astype(jnp.int8)
    if n_pad != N:
        x = jnp.pad(x, ((0, n_pad - N), (0, 0)))
        adj_i8 = jnp.pad(adj_i8, ((0, n_pad - N), (0, n_pad - N)))

    # ---- Pass 1: projection + per-node score halves ----
    z_pad, e_src, e_dst = pl.pallas_call(
        functools.partial(project_kernel, h_dim=H),
        grid=(n_pad // block_m,),
        in_specs=[
            pl.BlockSpec((block_m, F), lambda i: (i, 0)),
            pl.BlockSpec((F, lane_w), lambda i: (0, 0)),
            pl.BlockSpec((1, lane_w), lambda i: (0, 0)),
            pl.BlockSpec((1, lane_w), lambda i: (0, 0)),
            pl.BlockSpec(memory_space=pltpu.MemorySpace.SMEM),
        ],
        out_specs=(
            pl.BlockSpec((block_m, lane_w), lambda i: (i, 0)),
            pl.BlockSpec((block_m, 1), lambda i: (i, 0)),
            pl.BlockSpec((block_m, 1), lambda i: (i, 0)),
        ),
        out_shape=(
            jax.ShapeDtypeStruct((n_pad, lane_w), jnp.bfloat16),   # z (bf16, lane-padded)
            jax.ShapeDtypeStruct((n_pad, 1), jnp.float32),
            jax.ShapeDtypeStruct((n_pad, 1), jnp.float32),
        ),
        compiler_params=pltpu.CompilerParams(dimension_semantics=("parallel",)),
    )(x, w, a1, a2, b)

    # Lane-dense row of source-node scores (O(N) reshape; avoids in-kernel transposes).
    e_dst_row = e_dst.reshape(1, n_pad)

    # ---- Pass 2: fused mask + online-max exp + normalized aggregation over column blocks ----
    # TODO(synk): for very sparse graphs, pass per-row-block lists of non-empty column blocks
    # via PrefetchScalarGridSpec and index adj/z/e_dst through them so empty tiles are never
    # DMA'd or exponentiated (grid = (row_blocks, max_nonempty) with a pl.when guard).
    z_resident = n_pad * lane_w * 2 <= (8 << 20)   # keep z in VMEM for the whole grid if it fits
    if z_resident:
        z_spec = pl.BlockSpec((n_pad, lane_w), lambda i, j: (0, 0))
    else:
        z_spec = pl.BlockSpec((block_n, lane_w), lambda i, j: (j, 0))

    z_bytes = (n_pad if z_resident else 2 * block_n) * lane_w * 2
    vmem_need = (2 * block_m * block_n                    # int8 adj tile, double-buffered
                 + z_bytes                                # z (resident or double-buffered)
                 + 2 * block_m * lane_w * 4               # lane-dense f32 accumulator
                 + 2 * (block_m + block_n) * 4            # e_src / e_dst tiles
                 + block_m * 4)                           # running-max scratch
    vmem_limit = int(min(48 << 20, max(32 << 20, 2 * vmem_need)))

    out_pad = pl.pallas_call(
        functools.partial(gat_attn_kernel, block_n=block_n, h_dim=H,
                          z_resident=z_resident),
        grid=(n_pad // block_m, n_pad // block_n),
        in_specs=[
            pl.BlockSpec((block_m, block_n), lambda i, j: (i, j)),   # adj tile (int8)
            z_spec,                                                  # z (bf16, lane-padded)
            pl.BlockSpec((block_m, 1), lambda i, j: (i, 0)),         # e_src_i (+ bias)
            pl.BlockSpec((1, block_n), lambda i, j: (0, j)),         # e_dst_j row
        ],
        out_specs=pl.BlockSpec((block_m, lane_w), lambda i, j: (i, 0)),  # resident accumulator
        out_shape=jax.ShapeDtypeStruct((n_pad, lane_w), jnp.float32),
        scratch_shapes=[pltpu.VMEM((block_m, 1), jnp.float32)],          # running row max
        compiler_params=pltpu.CompilerParams(
            dimension_semantics=("parallel", "arbitrary"),
            vmem_limit_bytes=vmem_limit),
    )(adj_i8, z_pad, e_src, e_dst_row)

    out = out_pad[:N, :H]
    rowsum = out_pad[:N, H]
    rowmax = out_pad[:N, H + 1]
    return out, e_src[:N, 0], e_dst[:N, 0], rowsum, rowmax


def gat_forward(x, adj_dense, rows, cols, fc_weight, a_weight, a_bias,
                *, block_m=256, block_n=512):
    """Full GATLayer.forward: (out, per-edge alpha in coalesced row-major edge order)."""
    out, e_src, e_dst, rowsum, rowmax = gat_forward_pallas(
        x, adj_dense, fc_weight, a_weight, a_bias, block_m=block_m, block_n=block_n)
    # O(E) glue consistent with the kernel's running-max rescaling:
    # alpha_e = exp(s_e - m_row) / sum_{j in N(row)} exp(s_rowj - m_row).
    s = e_src[rows] + e_dst[cols]                  # bias already folded into e_src
    s = jnp.where(s > 0, s, LEAKY_SLOPE * s)
    alpha_edges = jnp.exp(s - rowmax[rows]) / rowsum[rows]
    return out, alpha_edges


def gat_ref_edges(x, rows, cols, fc_weight, a_weight, a_bias, N):
    """Pure-JAX f32 reference mirroring the torch sparse/edge-list formulation."""
    z = jnp.dot(x, fc_weight.T, precision=jax.lax.Precision.HIGHEST)       # (N, H)
    zcat = jnp.concatenate([z[rows], z[cols]], axis=1)                     # (E, 2H)
    h = jnp.dot(zcat, a_weight.T, precision=jax.lax.Precision.HIGHEST) + a_bias
    h = jnp.where(h > 0, h, LEAKY_SLOPE * h)[:, 0]
    h = jnp.exp(h)
    h_sum = jax.ops.segment_sum(h, rows, num_segments=N)
    alpha = h / h_sum[rows]
    out = jax.ops.segment_sum(alpha[:, None] * z[cols], rows, num_segments=N)
    return out, alpha


if __name__ == "__main__":
    # N=1000 exercises padding (-> 1024), a 4x2 pass-2 grid with 256x512 tiles (>= 2 row
    # blocks for v7x), and the resident-z path; feature sizes stay small.
    N, n_feat, n_hidden = 1000, 32, 32

    key = jax.random.PRNGKey(0)
    kx, kw, kaw, kab = jax.random.split(key, 4)

    # Deterministic "nn.Linear"-style init (uniform +- 1/sqrt(fan_in)).
    x = jax.random.normal(kx, (N, n_feat), dtype=jnp.float32)
    fc_bound = 1.0 / np.sqrt(n_feat)
    fc_weight = jax.random.uniform(kw, (n_hidden, n_feat), jnp.float32, -fc_bound, fc_bound)
    a_bound = 1.0 / np.sqrt(2 * n_hidden)
    a_weight = jax.random.uniform(kaw, (1, 2 * n_hidden), jnp.float32, -a_bound, a_bound)
    a_bias = jax.random.uniform(kab, (1,), jnp.float32, -a_bound, a_bound)

    # Deterministic sparse graph: self-loops + ring(+-1) + a chord; edges sorted row-major,
    # matching what adj.coalesce().indices() would yield in torch.
    edges = set()
    for i in range(N):
        edges.add((i, i))
        edges.add((i, (i + 1) % N))
        edges.add((i, (i - 1) % N))
        edges.add((i, (i + 7) % N))
    edges = sorted(edges)
    rows = jnp.asarray([e[0] for e in edges], dtype=jnp.int32)
    cols = jnp.asarray([e[1] for e in edges], dtype=jnp.int32)
    # Build the dense mask directly as int8 (no f32 (N,N) intermediate).
    adj_i8 = jnp.zeros((N, N), jnp.int8).at[rows, cols].set(1)

    out, alpha_edges = gat_forward(x, adj_i8, rows, cols, fc_weight, a_weight, a_bias)
    out = jax.block_until_ready(out)
    alpha_edges = jax.block_until_ready(alpha_edges)

    # Validate against an edge-list (scatter/gather) f32 reference of the torch forward.
    # Tolerances are loosened vs an all-f32 kernel because the h @ z MXU matmul (and the
    # rowsum it carries via the ones-column) is fed in bf16 with f32 accumulation.
    out_ref, alpha_ref = gat_ref_edges(x, rows, cols, fc_weight, a_weight, a_bias, N)
    np.testing.assert_allclose(np.asarray(out), np.asarray(out_ref), rtol=2e-2, atol=1e-2)
    np.testing.assert_allclose(np.asarray(alpha_edges), np.asarray(alpha_ref),
                               rtol=2e-2, atol=1e-5)

    print("KERNEL_OK")
</pallas_src>

<mosaic_0001>
module attributes {stable_mosaic.version = 11 : i64} {
  func.func @project_kernel(%arg0: i32, %arg1: memref<256x32xf32, #tpu.memory_space<vmem>>, %arg2: memref<32x128xf32, #tpu.memory_space<vmem>>, %arg3: memref<1x128xf32, #tpu.memory_space<vmem>>, %arg4: memref<1x128xf32, #tpu.memory_space<vmem>>, %arg5: memref<1x1xf32, #tpu.memory_space<smem>>, %arg6: memref<256x128xbf16, #tpu.memory_space<vmem>>, %arg7: memref<256x1xf32, #tpu.memory_space<vmem>>, %arg8: memref<256x1xf32, #tpu.memory_space<vmem>>) attributes {dimension_semantics = [#tpu.dimension_semantics<parallel>], iteration_bounds = array<i64: 4>, scalar_prefetch = 0 : i64, scratch_operands = 0 : i64, tpu.core_type = #tpu.core_type<tc>, window_params = [{transform_indices = @transform_0, window_bounds = array<i64: 256, 32>}, {pipeline_mode = #tpu.pipeline_mode<synchronous>, transform_indices = @transform_1, window_bounds = array<i64: 32, 128>}, {pipeline_mode = #tpu.pipeline_mode<synchronous>, transform_indices = @transform_2, window_bounds = array<i64: 1, 128>}, {pipeline_mode = #tpu.pipeline_mode<synchronous>, transform_indices = @transform_3, window_bounds = array<i64: 1, 128>}, {transform_indices = @transform_4, window_bounds = array<i64: 1, 1>}, {transform_indices = @transform_5, window_bounds = array<i64: 256, 128>}, {transform_indices = @transform_6, window_bounds = array<i64: 256, 1>}, {transform_indices = @transform_7, window_bounds = array<i64: 256, 1>}]} {
    %c0 = arith.constant 0 : index
    %c0_0 = arith.constant 0 : index
    %0 = vector.load %arg1[%c0, %c0_0] : memref<256x32xf32, #tpu.memory_space<vmem>>, vector<256x32xf32>
    %c0_1 = arith.constant 0 : index
    %c0_2 = arith.constant 0 : index
    %1 = vector.load %arg2[%c0_1, %c0_2] : memref<32x128xf32, #tpu.memory_space<vmem>>, vector<32x128xf32>
    %cst = arith.constant dense<0.000000e+00> : vector<256x128xf32>
    %2 = tpu.matmul %0, %1, %cst {dimension_numbers = #tpu.dot_dimension_numbers<[1], [0], [0], [1], [0, 0, 1, 1], [], []>} : vector<256x32xf32>, vector<32x128xf32>, vector<256x128xf32> -> vector<256x128xf32>
    %c0_3 = arith.constant 0 : index
    %c0_4 = arith.constant 0 : index
    %3 = vector.load %arg3[%c0_3, %c0_4] : memref<1x128xf32, #tpu.memory_space<vmem>>, vector<1x128xf32>
    %4 = vector.broadcast %3 : vector<1x128xf32> to vector<256x128xf32>
    %5 = arith.mulf %2, %4 : vector<256x128xf32>
    %cst_5 = arith.constant dense<0.000000e+00> : vector<256xf32>
    %6 = vector.multi_reduction <add>, %5, %cst_5 [1] : vector<256x128xf32> to vector<256xf32>
    %7 = vector.shape_cast %6 : vector<256xf32> to vector<256x1xf32>
    %c0_6 = arith.constant 0 : index
    %c0_7 = arith.constant 0 : index
    %8 = memref.load %arg5[%c0_6, %c0_7] : memref<1x1xf32, #tpu.memory_space<smem>>
    %9 = vector.broadcast %8 : f32 to vector<256x1xf32>
    %10 = arith.addf %7, %9 : vector<256x1xf32>
    %c0_8 = arith.constant 0 : index
    %c0_9 = arith.constant 0 : index
    %11 = vector.load %arg7[%c0_8, %c0_9] : memref<256x1xf32, #tpu.memory_space<vmem>>, vector<256x1xf32>
    tpu.vector_store %arg7[%c0_8, %c0_9], %10 {strides = array<i32>} : memref<256x1xf32, #tpu.memory_space<vmem>>, vector<256x1xf32>,
    %c0_10 = arith.constant 0 : index
    %c0_11 = arith.constant 0 : index
    %12 = vector.load %arg4[%c0_10, %c0_11] : memref<1x128xf32, #tpu.memory_space<vmem>>, vector<1x128xf32>
    %13 = vector.broadcast %12 : vector<1x128xf32> to vector<256x128xf32>
    %14 = arith.mulf %2, %13 : vector<256x128xf32>
    %cst_12 = arith.constant dense<0.000000e+00> : vector<256xf32>
    %15 = vector.multi_reduction <add>, %14, %cst_12 [1] : vector<256x128xf32> to vector<256xf32>
    %16 = vector.shape_cast %15 : vector<256xf32> to vector<256x1xf32>
    %c0_13 = arith.constant 0 : index
    %c0_14 = arith.constant 0 : index
    %17 = vector.load %arg8[%c0_13, %c0_14] : memref<256x1xf32, #tpu.memory_space<vmem>>, vector<256x1xf32>
    tpu.vector_store %arg8[%c0_13, %c0_14], %16 {strides = array<i32>} : memref<256x1xf32, #tpu.memory_space<vmem>>, vector<256x1xf32>,
    %18 = tpu.iota {dimensions = array<i32: 1>} : vector<256x128xi32>
    %c32_i32 = arith.constant 32 : i32
    %19 = vector.broadcast %c32_i32 : i32 to vector<256x128xi32>
    %20 = arith.cmpi eq, %18, %19 : vector<256x128xi32>
    %cst_15 = arith.constant 1.000000e+00 : f32
    %21 = vector.broadcast %cst_15 : f32 to vector<256x128xf32>
    %22 = arith.select %20, %21, %2 : vector<256x128xi1>, vector<256x128xf32>
    %23 = arith.truncf %22 : vector<256x128xf32> to vector<256x128xbf16>
    %c0_16 = arith.constant 0 : index
    %c0_17 = arith.constant 0 : index
    %24 = vector.load %arg6[%c0_16, %c0_17] : memref<256x128xbf16, #tpu.memory_space<vmem>>, vector<256x128xbf16>
    tpu.vector_store %arg6[%c0_16, %c0_17], %23 {strides = array<i32>} : memref<256x128xbf16, #tpu.memory_space<vmem>>, vector<256x128xbf16>,
    return
  }
  func.func @transform_0(%arg0: i32) -> (i32, i32) {
    %c0_i32 = arith.constant 0 : i32
    %c0_i32_0 = arith.constant 0 : i32
    return %arg0, %c0_i32 : i32, i32
  }
  func.func @transform_1(%arg0: i32) -> (i32, i32) {
    %c0_i32 = arith.constant 0 : i32
    %c0_i32_0 = arith.constant 0 : i32
    %c0_i32_1 = arith.constant 0 : i32
    return %c0_i32, %c0_i32_0 : i32, i32
  }
  func.func @transform_2(%arg0: i32) -> (i32, i32) {
    %c0_i32 = arith.constant 0 : i32
    %c0_i32_0 = arith.constant 0 : i32
    %c0_i32_1 = arith.constant 0 : i32
    return %c0_i32, %c0_i32_0 : i32, i32
  }
  func.func @transform_3(%arg0: i32) -> (i32, i32) {
    %c0_i32 = arith.constant 0 : i32
    %c0_i32_0 = arith.constant 0 : i32
    %c0_i32_1 = arith.constant 0 : i32
    return %c0_i32, %c0_i32_0 : i32, i32
  }
  func.func @transform_4(%arg0: i32) -> (i32, i32) {
    %c0_i32 = arith.constant 0 : i32
    %c0_i32_0 = arith.constant 0 : i32
    %c0_i32_1 = arith.constant 0 : i32
    return %c0_i32, %c0_i32_0 : i32, i32
  }
  func.func @transform_5(%arg0: i32) -> (i32, i32) {
    %c0_i32 = arith.constant 0 : i32
    %c0_i32_0 = arith.constant 0 : i32
    return %arg0, %c0_i32 : i32, i32
  }
  func.func @transform_6(%arg0: i32) -> (i32, i32) {
    %c0_i32 = arith.constant 0 : i32
    %c0_i32_0 = arith.constant 0 : i32
    return %arg0, %c0_i32 : i32, i32
  }
  func.func @transform_7(%arg0: i32) -> (i32, i32) {
    %c0_i32 = arith.constant 0 : i32
    %c0_i32_0 = arith.constant 0 : i32
    return %arg0, %c0_i32 : i32, i32
  }
}

</mosaic_0001>

<llo_original>
// kernel: tpu_custom_call.1
$region0: #{tpu_custom_call.1}
  #allocation0 [shape = 'u32[]', space=smem, size = 0x4, offset = 0x4, fixed_abs, tag = 'smem constant byte address 0x4 - core index']
  #allocation1 [shape = 'u32[72,128]{1,0:T(1,128)}', space=vmem, size = 0x9000, scoped, tag = 'internal scratch']
  #allocation2 [shape = 'f32[1,1]{1,0:T(1,128)S(6)}', space=smem, size = 0x200, scoped, tag = 'scoped memory for tpu_custom_call.1']
  %s0 = inlined_call_operand.vmem [shape: f32[1024,32], index: 0, kind: input, shape index: {}]
  %s1 = inlined_call_operand.vmem [shape: f32[32,128], index: 1, kind: input, shape index: {}]
  %s2 = inlined_call_operand.vmem [shape: f32[1,128], index: 2, kind: input, shape index: {}]
  %s3 = inlined_call_operand.vmem [shape: f32[1,128], index: 3, kind: input, shape index: {}]
  %s4 = inlined_call_operand.<no memory space> [shape: f32[1,1], index: 4, kind: input, shape index: {}]
  %s5 = inlined_call_operand.hbm [shape: bf16[1024,128], index: 5, kind: output, shape index: {0}]
  %s6 = inlined_call_operand.vmem [shape: f32[1024,1], index: 6, kind: output, shape index: {1}]
  %s7 = inlined_call_operand.vmem [shape: f32[1024,1], index: 7, kind: output, shape index: {2}]
  %8 = xla_tuple %s5, %s6, %s7
  %s9 = sld [smem:[#allocation0]]
  $region69: #{tpu_custom_call.1} parent=0
    _
  %s11 = ssub.s32 1, %s9
  %s12 = scalar_select 0, %s11, %s9
  %13 = sst [smem:[#allocation2]] %s4
  $region1: #{tpu_custom_call.1} parent=0
    #allocation3 [shape = 'u8[131072]{0}', space=vmem, size = 0x20000, scoped, tag = 'output window, operand 0']
    #allocation4 [shape = 's32[2]{0}', space=sflag, size = 0x8, scoped, tag = 'scoped memory for tpu_custom_call.1']
    %14 = vsyncpa [#allocation4], 0
    %s15 = scalar_lea.sflag [#allocation4], 1
    %16 = vsyncpa %s15, 0
    loop: start=0, step=1, limit=6
    $region2: #{tpu_custom_call.1} parent=1 // loop_pre_header
      _
    $region3: #{tpu_custom_call.1} parent=1 // loop_header
      %s18 = sphi 0, %s22
      %p19 = scmp.ge.s32.totalorder %s18, 6
      %s28 = sphi 0, %s30
      %s31 = sphi 0, %s28
      %s32 = sphi 0, %s31
      %s48 = sphi 0, %s32
      %s52 = sphi 0, %s52
      %s54 = sphi 0, %s52
      %s55 = sphi 0, %s54
      %s69 = sphi 0, %s55
      %s73 = sphi 0, %s73
      %s75 = sphi 0, %s73
      %s76 = sphi 0, %s75
      %s90 = sphi 0, %s76
      %s94 = sphi 0, %s94
      %s96 = sphi 0, %s94
      %s97 = sphi 0, %s96
      %s111 = sphi 0, %s97
      %s115 = sphi 0, %s115
      %s117 = sphi 0, %s115
      %s118 = sphi 0, %s117
      %s132 = sphi 0, %s118
      %s138 = sphi 0, %s140
      %s141 = sphi 0, %s138
      %s142 = sphi 0, %s141
      %s158 = sphi 0, %s142
      %s164 = sphi 0, %s166
      %s167 = sphi 0, %s164
      %s168 = sphi 0, %s167
      %s184 = sphi 0, %s168
      %s190 = sphi 0, %s192
      %s193 = sphi 0, %s190
      %s194 = sphi 0, %s193
      %s210 = sphi 0, %s194
    $region4: #{tpu_custom_call.1} parent=1 // loop_header_branch
      %21 = sbr.rel (%p19) target = $region8
    $region5: #{tpu_custom_call.1} parent=1 // loop_body
      %s23 = ssub.s32 %s18, 1
      %s24 = ssub.s32 %s18, 2
      %s25 = sadd.s32 %s18, 1
      %s26 = ssub.s32 %s18, %s25
      %p27 = scmp.eq.s32.totalorder %s26, 0
      %s29 = sadd.s32 %s28, 1
      %s30 = scalar_select %p27, %s28, %s29
      %p33 = pneg %p27
      %p34 = scmp.eq.s32.totalorder %s18, 3
      %p35 = por %p33, %p34
      %p36 = scmp.ne.s32.totalorder %s28, %s31
      %p37 = scmp.eq.s32.totalorder %s18, 0
      %p38 = por %p36, %p37
      %p39 = scmp.ne.s32.totalorder %s28, %s31
      %p40 = scmp.eq.s32.totalorder %s23, 3
      %p41 = por %p39, %p40
      %p42 = scmp.ne.s32.totalorder %s31, %s32
      %p43 = scmp.eq.s32.totalorder %s23, 0
      %p44 = por %p42, %p43
      %p45 = scmp.ne.s32.totalorder %s31, %s32
      %p46 = scmp.eq.s32.totalorder %s24, 3
      %p47 = por %p45, %p46
      %p49 = scmp.ne.s32.totalorder %s32, %s48
      %p50 = scmp.eq.s32.totalorder %s24, 0
      %p51 = por %p49, %p50
      %s53 = sadd.s32 %s52, 1
      %p56 = scmp.eq.s32.totalorder %s18, 3
      %p57 = scmp.ne.s32.totalorder %s52, %s54
      %p58 = scmp.eq.s32.totalorder %s18, 0
      %p59 = por %p57, %p58
      %p60 = scmp.ne.s32.totalorder %s52, %s54
      %p61 = scmp.eq.s32.totalorder %s23, 3
      %p62 = por %p60, %p61
      %p63 = scmp.ne.s32.totalorder %s54, %s55
      %p64 = scmp.eq.s32.totalorder %s23, 0
      %p65 = por %p63, %p64
      %p66 = scmp.ne.s32.totalorder %s54, %s55
      %p67 = scmp.eq.s32.totalorder %s24, 3
      %p68 = por %p66, %p67
      %p70 = scmp.ne.s32.totalorder %s55, %s69
      %p71 = scmp.eq.s32.totalorder %s24, 0
      %p72 = por %p70, %p71
      %s74 = sadd.s32 %s73, 1
      %p77 = scmp.eq.s32.totalorder %s18, 3
      %p78 = scmp.ne.s32.totalorder %s73, %s75
      %p79 = scmp.eq.s32.totalorder %s18, 0
      %p80 = por %p78, %p79
      %p81 = scmp.ne.s32.totalorder %s73, %s75
      %p82 = scmp.eq.s32.totalorder %s23, 3
      %p83 = por %p81, %p82
      %p84 = scmp.ne.s32.totalorder %s75, %s76
      %p85 = scmp.eq.s32.totalorder %s23, 0
      %p86 = por %p84, %p85
      %p87 = scmp.ne.s32.totalorder %s75, %s76
      %p88 = scmp.eq.s32.totalorder %s24, 3
      %p89 = por %p87, %p88
      %p91 = scmp.ne.s32.totalorder %s76, %s90
      %p92 = scmp.eq.s32.totalorder %s24, 0
      %p93 = por %p91, %p92
      %s95 = sadd.s32 %s94, 1
      %p98 = scmp.eq.s32.totalorder %s18, 3
      %p99 = scmp.ne.s32.totalorder %s94, %s96
      %p100 = scmp.eq.s32.totalorder %s18, 0
      %p101 = por %p99, %p100
      %p102 = scmp.ne.s32.totalorder %s94, %s96
      %p103 = scmp.eq.s32.totalorder %s23, 3
      %p104 = por %p102, %p103
      %p105 = scmp.ne.s32.totalorder %s96, %s97
      %p106 = scmp.eq.s32.totalorder %s23, 0
      %p107 = por %p105, %p106
      %p108 = scmp.ne.s32.totalorder %s96, %s97
      %p109 = scmp.eq.s32.totalorder %s24, 3
      %p110 = por %p108, %p109
      %p112 = scmp.ne.s32.totalorder %s97, %s111
      %p113 = scmp.eq.s32.totalorder %s24, 0
      %p114 = por %p112, %p113
      %s116 = sadd.s32 %s115, 1
      %p119 = scmp.eq.s32.totalorder %s18, 3
      %p120 = scmp.ne.s32.totalorder %s115, %s117
      %p121 = scmp.eq.s32.totalorder %s18, 0
      %p122 = por %p120, %p121
      %p123 = scmp.ne.s32.totalorder %s115, %s117
      %p124 = scmp.eq.s32.totalorder %s23, 3
      %p125 = por %p123, %p124
      %p126 = scmp.ne.s32.totalorder %s117, %s118
      %p127 = scmp.eq.s32.totalorder %s23, 0
      %p128 = por %p126, %p127
      %p129 = scmp.ne.s32.totalorder %s117, %s118
      %p130 = scmp.eq.s32.totalorder %s24, 3
      %p131 = por %p129, %p130
      %p133 = scmp.ne.s32.totalorder %s118, %s132
      %p134 = scmp.eq.s32.totalorder %s24, 0
      %p135 = por %p133, %p134
      %s136 = ssub.s32 %s18, %s25
      %p137 = scmp.eq.s32.totalorder %s136, 0
      %s139 = sadd.s32 %s138, 1
      %s140 = scalar_select %p137, %s138, %s139
      %p143 = pneg %p137
      %p144 = scmp.eq.s32.totalorder %s18, 3
      %p145 = por %p143, %p144
      %p146 = scmp.ne.s32.totalorder %s138, %s141
      %p147 = scmp.eq.s32.totalorder %s18, 0
      %p148 = por %p146, %p147
      %p149 = scmp.ne.s32.totalorder %s138, %s141
      %p150 = scmp.eq.s32.totalorder %s23, 3
      %p151 = por %p149, %p150
      %p152 = scmp.ne.s32.totalorder %s141, %s142
      %p153 = scmp.eq.s32.totalorder %s23, 0
      %p154 = por %p152, %p153
      %p155 = scmp.ne.s32.totalorder %s141, %s142
      %p156 = scmp.eq.s32.totalorder %s24, 3
      %p157 = por %p155, %p156
      %p159 = scmp.ne.s32.totalorder %s142, %s158
      %p160 = scmp.eq.s32.totalorder %s24, 0
      %p161 = por %p159, %p160
      %s162 = ssub.s32 %s18, %s25
      %p163 = scmp.eq.s32.totalorder %s162, 0
      %s165 = sadd.s32 %s164, 1
      %s166 = scalar_select %p163, %s164, %s165
      %p169 = pneg %p163
      %p170 = scmp.eq.s32.totalorder %s18, 3
      %p171 = por %p169, %p170
      %p172 = scmp.ne.s32.totalorder %s164, %s167
      %p173 = scmp.eq.s32.totalorder %s18, 0
      %p174 = por %p172, %p173
      %p175 = scmp.ne.s32.totalorder %s164, %s167
      %p176 = scmp.eq.s32.totalorder %s23, 3
      %p177 = por %p175, %p176
      %p178 = scmp.ne.s32.totalorder %s167, %s168
      %p179 = scmp.eq.s32.totalorder %s23, 0
      %p180 = por %p178, %p179
      %p181 = scmp.ne.s32.totalorder %s167, %s168
      %p182 = scmp.eq.s32.totalorder %s24, 3
      %p183 = por %p181, %p182
      %p185 = scmp.ne.s32.totalorder %s168, %s184
      %p186 = scmp.eq.s32.totalorder %s24, 0
      %p187 = por %p185, %p186
      %s188 = ssub.s32 %s18, %s25
      %p189 = scmp.eq.s32.totalorder %s188, 0
      %s191 = sadd.s32 %s190, 1
      %s192 = scalar_select %p189, %s190, %s191
      %p195 = pneg %p189
      %p196 = scmp.eq.s32.totalorder %s18, 3
      %p197 = por %p195, %p196
      %p198 = scmp.ne.s32.totalorder %s190, %s193
      %p199 = scmp.eq.s32.totalorder %s18, 0
      %p200 = por %p198, %p199
      %p201 = scmp.ne.s32.totalorder %s190, %s193
      %p202 = scmp.eq.s32.totalorder %s23, 3
      %p203 = por %p201, %p202
      %p204 = scmp.ne.s32.totalorder %s193, %s194
      %p205 = scmp.eq.s32.totalorder %s23, 0
      %p206 = por %p204, %p205
      %p207 = scmp.ne.s32.totalorder %s193, %s194
      %p208 = scmp.eq.s32.totalorder %s24, 3
      %p209 = por %p207, %p208
      %p211 = scmp.ne.s32.totalorder %s194, %s210
      %p212 = scmp.eq.s32.totalorder %s24, 0
      %p213 = por %p211, %p212
      %p214 = scmp.le.s32.totalorder 1, %s18
      %p215 = scmp.lt.s32.totalorder %s18, 5
      %p216 = pnand %p214, %p215
      %p217 = pneg %p216
      // Predicated region
      $region9: #{tpu_custom_call.1} parent=5 // pred_check
        _
      $region10: #{tpu_custom_call.1} parent=5 // pred_check_branch
        %219 = sbr.rel (%p216) target = $region12
      $region11: #{tpu_custom_call.1} parent=5 // pred_region
        %s220 = ssub.s32 %s18, 1
        // Predicated region
        $region13: #{tpu_custom_call.1} parent=11 // pred_check
          %p221 = pneg %p65
        $region14: #{tpu_custom_call.1} parent=11 // pred_check_branch
          %223 = sbr.rel (%p221) target = $region16
        $region15: #{tpu_custom_call.1} parent=11 // pred_region
          _
        $region16: #{tpu_custom_call.1} parent=11 // pred_fallthru
          _
        // Predicated region
        $region17: #{tpu_custom_call.1} parent=11 // pred_check
          %p224 = pneg %p86
        $region18: #{tpu_custom_call.1} parent=11 // pred_check_branch
          %226 = sbr.rel (%p224) target = $region20
        $region19: #{tpu_custom_call.1} parent=11 // pred_region
          _
        $region20: #{tpu_custom_call.1} parent=11 // pred_fallthru
          _
        // Predicated region
        $region21: #{tpu_custom_call.1} parent=11 // pred_check
          %p227 = pneg %p107
        $region22: #{tpu_custom_call.1} parent=11 // pred_check_branch
          %229 = sbr.rel (%p227) target = $region24
        $region23: #{tpu_custom_call.1} parent=11 // pred_region
          _
        $region24: #{tpu_custom_call.1} parent=11 // pred_fallthru
          _
        // Predicated region
        $region25: #{tpu_custom_call.1} parent=11 // pred_check
          %p230 = pneg %p128
        $region26: #{tpu_custom_call.1} parent=11 // pred_check_branch
          %232 = sbr.rel (%p230) target = $region28
        $region27: #{tpu_custom_call.1} parent=11 // pred_region
          _
        $region28: #{tpu_custom_call.1} parent=11 // pred_fallthru
          _
      $region12: #{tpu_custom_call.1} parent=5 // pred_fallthru
        _
      %p233 = scmp.lt.s32.totalorder %s18, 4
      // Predicated region
      $region29: #{tpu_custom_call.1} parent=5 // pred_check
        %p234 = pneg %p233
      $region30: #{tpu_custom_call.1} parent=5 // pred_check_branch
        %236 = sbr.rel (%p234) target = $region32
      $region31: #{tpu_custom_call.1} parent=5 // pred_region
        // Predicated region
        $region33: #{tpu_custom_call.1} parent=31 // pred_check
          %p237 = pneg %p38
        $region34: #{tpu_custom_call.1} parent=31 // pred_check_branch
          %239 = sbr.rel (%p237) target = $region36
        $region35: #{tpu_custom_call.1} parent=31 // pred_region
          %s240 = smul.u32 32, %s18
          %p241 = scmp.lt.s32.totalorder %s240, 127
          %s242 = scalar_select %p241, %s240, 127
          %s243 = smul.addr %s242, 8
          %s244 = scalar_lea.vmem %s0, %s243
          %s245 = smul.u32 32, %s18
        $region36: #{tpu_custom_call.1} parent=31 // pred_fallthru
          _
      $region32: #{tpu_custom_call.1} parent=5 // pred_fallthru
        _
      %p246 = scmp.le.s32.totalorder 1, %s18
      %p247 = scmp.lt.s32.totalorder %s18, 5
      %p248 = pnand %p246, %p247
      %p249 = pneg %p248
      // Predicated region
      $region37: #{tpu_custom_call.1} parent=5 // pred_check
        _
      $region38: #{tpu_custom_call.1} parent=5 // pred_check_branch
        %251 = sbr.rel (%p248) target = $region40
      $region39: #{tpu_custom_call.1} parent=5 // pred_region
        %s252 = ssub.s32 %s18, 1
        %s253 = smul.u32 32, %s23
        %p254 = scmp.lt.s32.totalorder %s253, 127
        %s255 = scalar_select %p254, %s253, 127
        %s256 = smul.addr %s255, 8
        %s257 = scalar_lea.vmem %s0, %s256
        %p258 = pneg %p44
        %p259 = pneg %p41
        %p260 = pneg %p65
        %p261 = pneg %p62
        %p262 = pneg %p86
        %p263 = pneg %p83
        %p264 = pneg %p107
        %p265 = pneg %p104
        %p266 = pneg %p128
        %p267 = pneg %p125
        %p268 = pneg %p154
        %p269 = pneg %p151
        %s270 = sand.u32 %s141, 1
        %s271 = scalar_lea.sflag [#allocation4], %s270
        %s272 = sand.u32 %s141, 1
        %s273 = smul.addr %s272, 128
        %s274 = scalar_lea.vmem [#allocation3], %s273
        %p275 = pneg %p180
        %p276 = pneg %p177
        %s277 = smul.u32 32, %s23
        %p278 = scmp.lt.s32.totalorder %s277, 127
        %s279 = scalar_select %p278, %s277, 127
        %s280 = smul.addr %s279, 8
        %s281 = scalar_lea.vmem %s6, %s280
        %p282 = pneg %p206
        %p283 = pneg %p203
        %s284 = smul.u32 32, %s23
        %p285 = scmp.lt.s32.totalorder %s284, 127
        %s286 = scalar_select %p285, %s284, 127
        %s287 = smul.addr %s286, 8
        %s288 = scalar_lea.vmem %s7, %s287
        %s289 = smul.u32 32, %s23
        %p290 = scmp.lt.s32.totalorder %s289, 127
        %s291 = scalar_select %p290, %s289, 127
        %s292 = smul.addr %s291, 8
        %s293 = scalar_lea.vmem %s0, %s292
        %s294 = smul.u32 32, %s23
        %s295 = smul.u32 32, %s23
        %s296 = smul.u32 32, %s23
        %p297 = scmp.lt.s32.totalorder %s296, 127
        %s298 = scalar_select %p297, %s296, 127
        %s299 = smul.addr %s298, 8
        %s300 = scalar_lea.vmem %s6, %s299
        %s301 = smul.u32 32, %s23
        %s302 = smul.u32 32, %s23
        %p303 = scmp.lt.s32.totalorder %s302, 127
        %s304 = scalar_select %p303, %s302, 127
        %s305 = smul.addr %s304, 8
        %s306 = scalar_lea.vmem %s7, %s305
        %s307 = smul.u32 32, %s23
        %v308 = vld [vmem:[%s293] sm:$0xff]
        %v309 = vld [vmem:[%s293 + $0x8] sm:$0xff]
        %v310 = vld [vmem:[%s293 + $0x10] sm:$0xff]
        %v311 = vld [vmem:[%s293 + $0x18] sm:$0xff]
        %v312 = vld [vmem:[%s293 + $0x20] sm:$0xff]
        %v313 = vld [vmem:[%s293 + $0x28] sm:$0xff]
        %v314 = vld [vmem:[%s293 + $0x30] sm:$0xff]
        %v315 = vld [vmem:[%s293 + $0x38] sm:$0xff]
        %v316 = vld [vmem:[%s293 + $0x40] sm:$0xff]
        %v317 = vld [vmem:[%s293 + $0x48] sm:$0xff]
        %v318 = vld [vmem:[%s293 + $0x50] sm:$0xff]
        %v319 = vld [vmem:[%s293 + $0x58] sm:$0xff]
        %v320 = vld [vmem:[%s293 + $0x60] sm:$0xff]
        %v321 = vld [vmem:[%s293 + $0x68] sm:$0xff]
        %v322 = vld [vmem:[%s293 + $0x70] sm:$0xff]
        %v323 = vld [vmem:[%s293 + $0x78] sm:$0xff]
        %v324 = vld [vmem:[%s293 + $0x80] sm:$0xff]
        %v325 = vld [vmem:[%s293 + $0x88] sm:$0xff]
        %v326 = vld [vmem:[%s293 + $0x90] sm:$0xff]
        %v327 = vld [vmem:[%s293 + $0x98] sm:$0xff]
        %v328 = vld [vmem:[%s293 + $0xa0] sm:$0xff]
        %v329 = vld [vmem:[%s293 + $0xa8] sm:$0xff]
        %v330 = vld [vmem:[%s293 + $0xb0] sm:$0xff]
        %v331 = vld [vmem:[%s293 + $0xb8] sm:$0xff]
        %v332 = vld [vmem:[%s293 + $0xc0] sm:$0xff]
        %v333 = vld [vmem:[%s293 + $0xc8] sm:$0xff]
        %v334 = vld [vmem:[%s293 + $0xd0] sm:$0xff]
        %v335 = vld [vmem:[%s293 + $0xd8] sm:$0xff]
        %v336 = vld [vmem:[%s293 + $0xe0] sm:$0xff]
        %v337 = vld [vmem:[%s293 + $0xe8] sm:$0xff]
        %v338 = vld [vmem:[%s293 + $0xf0] sm:$0xff]
        %v339 = vld [vmem:[%s293 + $0xf8] sm:$0xff]
        %v340 = vld [vmem:[%s1] sm:$0xff]
        %v341 = vld [vmem:[%s1 + $0x8] sm:$0xff]
        %v342 = vld [vmem:[%s1 + $0x10] sm:$0xff]
        %v343 = vld [vmem:[%s1 + $0x18] sm:$0xff]
        %vm344 = vcmask 261120
        %v346 = vsel %vm344, %v308, 0
        %v349 = vsel %vm344, %v309, 0
        %v352 = vsel %vm344, %v310, 0
        %v355 = vsel %vm344, %v311, 0
        %v358 = vsel %vm344, %v312, 0
        %v361 = vsel %vm344, %v313, 0
        %v364 = vsel %vm344, %v314, 0
        %v367 = vsel %vm344, %v315, 0
        %v370 = vsel %vm344, %v316, 0
        %v373 = vsel %vm344, %v317, 0
        %v376 = vsel %vm344, %v318, 0
        %v379 = vsel %vm344, %v319, 0
        %v382 = vsel %vm344, %v320, 0
        %v385 = vsel %vm344, %v321, 0
        %v388 = vsel %vm344, %v322, 0
        %v391 = vsel %vm344, %v323, 0
        %v394 = vsel %vm344, %v324, 0
        %v397 = vsel %vm344, %v325, 0
        %v400 = vsel %vm344, %v326, 0
        %v403 = vsel %vm344, %v327, 0
        %v406 = vsel %vm344, %v328, 0
        %v409 = vsel %vm344, %v329, 0
        %v412 = vsel %vm344, %v330, 0
        %v415 = vsel %vm344, %v331, 0
        %v418 = vsel %vm344, %v332, 0
        %v421 = vsel %vm344, %v333, 0
        %v424 = vsel %vm344, %v334, 0
        %v427 = vsel %vm344, %v335, 0
        %v430 = vsel %vm344, %v336, 0
        %v433 = vsel %vm344, %v337, 0
        %v436 = vsel %vm344, %v338, 0
        %v439 = vsel %vm344, %v339, 0
        %441 = vmatpush.msra.mxu0 0.0
        %442 = vmatpush.msra.mxu0 0.0
        %443 = vmatpush.msra.mxu0 0.0
        %444 = vmatpush.msra.mxu0 0.0
        %445 = vmatpush.msra.mxu0 0.0
        %446 = vmatpush.msra.mxu0 0.0
        %447 = vmatpush.msra.mxu0 0.0
        %448 = vmatpush.msra.mxu0 0.0
        %449 = vmatpush.msra.mxu0 0.0
        %450 = vmatpush.msra.mxu0 0.0
        %451 = vmatpush.msra.mxu0 0.0
        %452 = vmatpush.msra.mxu0 0.0
        %453 = vmatpush.msra.mxu0 %v343
        %454 = vmatpush.msra.mxu0 %v342
        %455 = vmatpush.msra.mxu0 %v341
        %456 = vmatpush.msra.mxu0 %v340
        %457 = vmatmul.f32.gmra.mxu0 %v346
        %v458 = vpop.f32.mrf.mxu0
        %v459 = vadd.f32 0.0, %v458
        %460 = vmatmul.f32.gmra.mxu0 %v349
        %v461 = vpop.f32.mrf.mxu0
        %v462 = vadd.f32 0.0, %v461
        %463 = vmatmul.f32.gmra.mxu0 %v352
        %v464 = vpop.f32.mrf.mxu0
        %v465 = vadd.f32 0.0, %v464
        %466 = vmatmul.f32.gmra.mxu0 %v355
        %v467 = vpop.f32.mrf.mxu0
        %v468 = vadd.f32 0.0, %v467
        %469 = vmatmul.f32.gmra.mxu0 %v358
        %v470 = vpop.f32.mrf.mxu0
        %v471 = vadd.f32 0.0, %v470
        %472 = vmatmul.f32.gmra.mxu0 %v361
        %v473 = vpop.f32.mrf.mxu0
        %v474 = vadd.f32 0.0, %v473
        %475 = vmatmul.f32.gmra.mxu0 %v364
        %v476 = vpop.f32.mrf.mxu0
        %v477 = vadd.f32 0.0, %v476
        %478 = vmatmul.f32.gmra.mxu0 %v367
        %v479 = vpop.f32.mrf.mxu0
        %v480 = vadd.f32 0.0, %v479
        %481 = vmatmul.f32.gmra.mxu0 %v370
        %v482 = vpop.f32.mrf.mxu0
        %v483 = vadd.f32 0.0, %v482
        %484 = vmatmul.f32.gmra.mxu0 %v373
        %v485 = vpop.f32.mrf.mxu0
        %v486 = vadd.f32 0.0, %v485
        %487 = vmatmul.f32.gmra.mxu0 %v376
        %v488 = vpop.f32.mrf.mxu0
        %v489 = vadd.f32 0.0, %v488
        %490 = vmatmul.f32.gmra.mxu0 %v379
        %v491 = vpop.f32.mrf.mxu0
        %v492 = vadd.f32 0.0, %v491
        %493 = vmatmul.f32.gmra.mxu0 %v382
        %v494 = vpop.f32.mrf.mxu0
        %v495 = vadd.f32 0.0, %v494
        %496 = vmatmul.f32.gmra.mxu0 %v385
        %v497 = vpop.f32.mrf.mxu0
        %v498 = vadd.f32 0.0, %v497
        %499 = vmatmul.f32.gmra.mxu0 %v388
        %v500 = vpop.f32.mrf.mxu0
        %v501 = vadd.f32 0.0, %v500
        %502 = vmatmul.f32.gmra.mxu0 %v391
        %v503 = vpop.f32.mrf.mxu0
        %v504 = vadd.f32 0.0, %v503
        %505 = vmatmul.f32.gmra.mxu0 %v394
        %v506 = vpop.f32.mrf.mxu0
        %v507 = vadd.f32 0.0, %v506
        %508 = vmatmul.f32.gmra.mxu0 %v397
        %v509 = vpop.f32.mrf.mxu0
        %v510 = vadd.f32 0.0, %v509
        %511 = vmatmul.f32.gmra.mxu0 %v400
        %v512 = vpop.f32.mrf.mxu0
        %v513 = vadd.f32 0.0, %v512
        %514 = vmatmul.f32.gmra.mxu0 %v403
        %v515 = vpop.f32.mrf.mxu0
        %v516 = vadd.f32 0.0, %v515
        %517 = vmatmul.f32.gmra.mxu0 %v406
        %v518 = vpop.f32.mrf.mxu0
        %v519 = vadd.f32 0.0, %v518
        %520 = vmatmul.f32.gmra.mxu0 %v409
        %v521 = vpop.f32.mrf.mxu0
        %v522 = vadd.f32 0.0, %v521
        %523 = vmatmul.f32.gmra.mxu0 %v412
        %v524 = vpop.f32.mrf.mxu0
        %v525 = vadd.f32 0.0, %v524
        %526 = vmatmul.f32.gmra.mxu0 %v415
        %v527 = vpop.f32.mrf.mxu0
        %v528 = vadd.f32 0.0, %v527
        %529 = vmatmul.f32.gmra.mxu0 %v418
        %v530 = vpop.f32.mrf.mxu0
        %v531 = vadd.f32 0.0, %v530
        %532 = vmatmul.f32.gmra.mxu0 %v421
        %v533 = vpop.f32.mrf.mxu0
        %v534 = vadd.f32 0.0, %v533
        %535 = vmatmul.f32.gmra.mxu0 %v424
        %v536 = vpop.f32.mrf.mxu0
        %v537 = vadd.f32 0.0, %v536
        %538 = vmatmul.f32.gmra.mxu0 %v427
        %v539 = vpop.f32.mrf.mxu0
        %v540 = vadd.f32 0.0, %v539
        %541 = vmatmul.f32.gmra.mxu0 %v430
        %v542 = vpop.f32.mrf.mxu0
        %v543 = vadd.f32 0.0, %v542
        %544 = vmatmul.f32.gmra.mxu0 %v433
        %v545 = vpop.f32.mrf.mxu0
        %v546 = vadd.f32 0.0, %v545
        %547 = vmatmul.f32.gmra.mxu0 %v436
        %v548 = vpop.f32.mrf.mxu0
        %v549 = vadd.f32 0.0, %v548
        %550 = vmatmul.f32.gmra.mxu0 %v439
        %v551 = vpop.f32.mrf.mxu0
        %v552 = vadd.f32 0.0, %v551
        %553 = vdwg.mxu0
        %v554 = vld [vmem:[%s2] sm:$0x1]
        %v556 = vperm.slane %v554, 0
        %v558 = vmul.f32 %v459, %v556
        %v559 = vmul.f32 %v462, %v556
        %v560 = vmul.f32 %v465, %v556
        %v561 = vmul.f32 %v468, %v556
        %v562 = vmul.f32 %v471, %v556
        %v563 = vmul.f32 %v474, %v556
        %v564 = vmul.f32 %v477, %v556
        %v565 = vmul.f32 %v480, %v556
        %v566 = vmul.f32 %v483, %v556
        %v567 = vmul.f32 %v486, %v556
        %v568 = vmul.f32 %v489, %v556
        %v569 = vmul.f32 %v492, %v556
        %v570 = vmul.f32 %v495, %v556
        %v571 = vmul.f32 %v498, %v556
        %v572 = vmul.f32 %v501, %v556
        %v573 = vmul.f32 %v504, %v556
        %v574 = vmul.f32 %v507, %v556
        %v575 = vmul.f32 %v510, %v556
        %v576 = vmul.f32 %v513, %v556
        %v577 = vmul.f32 %v516, %v556
        %v578 = vmul.f32 %v519, %v556
        %v579 = vmul.f32 %v522, %v556
        %v580 = vmul.f32 %v525, %v556
        %v581 = vmul.f32 %v528, %v556
        %v582 = vmul.f32 %v531, %v556
        %v583 = vmul.f32 %v534, %v556
        %v584 = vmul.f32 %v537, %v556
        %v585 = vmul.f32 %v540, %v556
        %v586 = vmul.f32 %v543, %v556
        %v587 = vmul.f32 %v546, %v556
        %v588 = vmul.f32 %v549, %v556
        %v589 = vmul.f32 %v552, %v556
        %590 = vadd.xlane.f32.xlu0 %v558
        %v591 = vpop.xlane.xlu0 %590
        %592 = vadd.xlane.f32.xlu0 %v559
        %v593 = vpop.xlane.xlu0 %592
        %594 = vadd.xlane.f32.xlu0 %v560
        %v595 = vpop.xlane.xlu0 %594
        %596 = vadd.xlane.f32.xlu0 %v561
        %v597 = vpop.xlane.xlu0 %596
        %598 = vadd.xlane.f32.xlu0 %v562
        %v599 = vpop.xlane.xlu0 %598
        %600 = vadd.xlane.f32.xlu0 %v563
        %v601 = vpop.xlane.xlu0 %600
        %602 = vadd.xlane.f32.xlu0 %v564
        %v603 = vpop.xlane.xlu0 %602
        %604 = vadd.xlane.f32.xlu0 %v565
        %v605 = vpop.xlane.xlu0 %604
        %606 = vadd.xlane.f32.xlu0 %v566
        %v607 = vpop.xlane.xlu0 %606
        %608 = vadd.xlane.f32.xlu0 %v567
        %v609 = vpop.xlane.xlu0 %608
        %610 = vadd.xlane.f32.xlu0 %v568
        %v611 = vpop.xlane.xlu0 %610
        %612 = vadd.xlane.f32.xlu0 %v569
        %v613 = vpop.xlane.xlu0 %612
        %614 = vadd.xlane.f32.xlu0 %v570
        %v615 = vpop.xlane.xlu0 %614
        %616 = vadd.xlane.f32.xlu0 %v571
        %v617 = vpop.xlane.xlu0 %616
        %618 = vadd.xlane.f32.xlu0 %v572
        %v619 = vpop.xlane.xlu0 %618
        %620 = vadd.xlane.f32.xlu0 %v573
        %v621 = vpop.xlane.xlu0 %620
        %622 = vadd.xlane.f32.xlu0 %v574
        %v623 = vpop.xlane.xlu0 %622
        %624 = vadd.xlane.f32.xlu0 %v575
        %v625 = vpop.xlane.xlu0 %624
        %626 = vadd.xlane.f32.xlu0 %v576
        %v627 = vpop.xlane.xlu0 %626
        %628 = vadd.xlane.f32.xlu0 %v577
        %v629 = vpop.xlane.xlu0 %628
        %630 = vadd.xlane.f32.xlu0 %v578
        %v631 = vpop.xlane.xlu0 %630
        %632 = vadd.xlane.f32.xlu0 %v579
        %v633 = vpop.xlane.xlu0 %632
        %634 = vadd.xlane.f32.xlu0 %v580
        %v635 = vpop.xlane.xlu0 %634
        %636 = vadd.xlane.f32.xlu0 %v581
        %v637 = vpop.xlane.xlu0 %636
        %638 = vadd.xlane.f32.xlu0 %v582
        %v639 = vpop.xlane.xlu0 %638
        %640 = vadd.xlane.f32.xlu0 %v583
        %v641 = vpop.xlane.xlu0 %640
        %642 = vadd.xlane.f32.xlu0 %v584
        %v643 = vpop.xlane.xlu0 %642
        %644 = vadd.xlane.f32.xlu0 %v585
        %v645 = vpop.xlane.xlu0 %644
        %646 = vadd.xlane.f32.xlu0 %v586
        %v647 = vpop.xlane.xlu0 %646
        %648 = vadd.xlane.f32.xlu0 %v587
        %v649 = vpop.xlane.xlu0 %648
        %650 = vadd.xlane.f32.xlu0 %v588
        %v651 = vpop.xlane.xlu0 %650
        %652 = vadd.xlane.f32.xlu0 %v589
        %v653 = vpop.xlane.xlu0 %652
        %s654 = sld [smem:[#allocation2]]
        %v655 = vstv %s654
        %v656 = vadd.f32 %v591, %v655
        %v657 = vadd.f32 %v593, %v655
        %v658 = vadd.f32 %v595, %v655
        %v659 = vadd.f32 %v597, %v655
        %v660 = vadd.f32 %v599, %v655
        %v661 = vadd.f32 %v601, %v655
        %v662 = vadd.f32 %v603, %v655
        %v663 = vadd.f32 %v605, %v655
        %v664 = vadd.f32 %v607, %v655
        %v665 = vadd.f32 %v609, %v655
        %v666 = vadd.f32 %v611, %v655
        %v667 = vadd.f32 %v613, %v655
        %v668 = vadd.f32 %v615, %v655
        %v669 = vadd.f32 %v617, %v655
        %v670 = vadd.f32 %v619, %v655
        %v671 = vadd.f32 %v621, %v655
        %v672 = vadd.f32 %v623, %v655
        %v673 = vadd.f32 %v625, %v655
        %v674 = vadd.f32 %v627, %v655
        %v675 = vadd.f32 %v629, %v655
        %v676 = vadd.f32 %v631, %v655
        %v677 = vadd.f32 %v633, %v655
        %v678 = vadd.f32 %v635, %v655
        %v679 = vadd.f32 %v637, %v655
        %v680 = vadd.f32 %v639, %v655
        %v681 = vadd.f32 %v641, %v655
        %v682 = vadd.f32 %v643, %v655
        %v683 = vadd.f32 %v645, %v655
        %v684 = vadd.f32 %v647, %v655
        %v685 = vadd.f32 %v649, %v655
        %v686 = vadd.f32 %v651, %v655
        %v687 = vadd.f32 %v653, %v655
        %vm688 = vcmask 7168
        %689 = vst.msk [vmem:[%s300] sm:$0xff] %vm688, %v656
        %690 = vst.msk [vmem:[%s300 + $0x8] sm:$0xff] %vm688, %v657
        %691 = vst.msk [vmem:[%s300 + $0x10] sm:$0xff] %vm688, %v658
        %692 = vst.msk [vmem:[%s300 + $0x18] sm:$0xff] %vm688, %v659
        %693 = vst.msk [vmem:[%s300 + $0x20] sm:$0xff] %vm688, %v660
        %694 = vst.msk [vmem:[%s300 + $0x28] sm:$0xff] %vm688, %v661
        %695 = vst.msk [vmem:[%s300 + $0x30] sm:$0xff] %vm688, %v662
        %696 = vst.msk [vmem:[%s300 + $0x38] sm:$0xff] %vm688, %v663
        %697 = vst.msk [vmem:[%s300 + $0x40] sm:$0xff] %vm688, %v664
        %698 = vst.msk [vmem:[%s300 + $0x48] sm:$0xff] %vm688, %v665
        %699 = vst.msk [vmem:[%s300 + $0x50] sm:$0xff] %vm688, %v666
        %700 = vst.msk [vmem:[%s300 + $0x58] sm:$0xff] %vm688, %v667
        %701 = vst.msk [vmem:[%s300 + $0x60] sm:$0xff] %vm688, %v668
        %702 = vst.msk [vmem:[%s300 + $0x68] sm:$0xff] %vm688, %v669
        %703 = vst.msk [vmem:[%s300 + $0x70] sm:$0xff] %vm688, %v670
        %704 = vst.msk [vmem:[%s300 + $0x78] sm:$0xff] %vm688, %v671
        %705 = vst.msk [vmem:[%s300 + $0x80] sm:$0xff] %vm688, %v672
        %706 = vst.msk [vmem:[%s300 + $0x88] sm:$0xff] %vm688, %v673
        %707 = vst.msk [vmem:[%s300 + $0x90] sm:$0xff] %vm688, %v674
        %708 = vst.msk [vmem:[%s300 + $0x98] sm:$0xff] %vm688, %v675
        %709 = vst.msk [vmem:[%s300 + $0xa0] sm:$0xff] %vm688, %v676
        %710 = vst.msk [vmem:[%s300 + $0xa8] sm:$0xff] %vm688, %v677
        %711 = vst.msk [vmem:[%s300 + $0xb0] sm:$0xff] %vm688, %v678
        %712 = vst.msk [vmem:[%s300 + $0xb8] sm:$0xff] %vm688, %v679
        %713 = vst.msk [vmem:[%s300 + $0xc0] sm:$0xff] %vm688, %v680
        %714 = vst.msk [vmem:[%s300 + $0xc8] sm:$0xff] %vm688, %v681
        %715 = vst.msk [vmem:[%s300 + $0xd0] sm:$0xff] %vm688, %v682
        %716 = vst.msk [vmem:[%s300 + $0xd8] sm:$0xff] %vm688, %v683
        %717 = vst.msk [vmem:[%s300 + $0xe0] sm:$0xff] %vm688, %v684
        %718 = vst.msk [vmem:[%s300 + $0xe8] sm:$0xff] %vm688, %v685
        %719 = vst.msk [vmem:[%s300 + $0xf0] sm:$0xff] %vm688, %v686
        %720 = vst.msk [vmem:[%s300 + $0xf8] sm:$0xff] %vm688, %v687
        %v721 = vld [vmem:[%s3] sm:$0x1]
        %v723 = vperm.slane %v721, 0
        %v725 = vmul.f32 %v459, %v723
        %v726 = vmul.f32 %v462, %v723
        %v727 = vmul.f32 %v465, %v723
        %v728 = vmul.f32 %v468, %v723
        %v729 = vmul.f32 %v471, %v723
        %v730 = vmul.f32 %v474, %v723
        %v731 = vmul.f32 %v477, %v723
        %v732 = vmul.f32 %v480, %v723
        %v733 = vmul.f32 %v483, %v723
        %v734 = vmul.f32 %v486, %v723
        %v735 = vmul.f32 %v489, %v723
        %v736 = vmul.f32 %v492, %v723
        %v737 = vmul.f32 %v495, %v723
        %v738 = vmul.f32 %v498, %v723
        %v739 = vmul.f32 %v501, %v723
        %v740 = vmul.f32 %v504, %v723
        %v741 = vmul.f32 %v507, %v723
        %v742 = vmul.f32 %v510, %v723
        %v743 = vmul.f32 %v513, %v723
        %v744 = vmul.f32 %v516, %v723
        %v745 = vmul.f32 %v519, %v723
        %v746 = vmul.f32 %v522, %v723
        %v747 = vmul.f32 %v525, %v723
        %v748 = vmul.f32 %v528, %v723
        %v749 = vmul.f32 %v531, %v723
        %v750 = vmul.f32 %v534, %v723
        %v751 = vmul.f32 %v537, %v723
        %v752 = vmul.f32 %v540, %v723
        %v753 = vmul.f32 %v543, %v723
        %v754 = vmul.f32 %v546, %v723
        %v755 = vmul.f32 %v549, %v723
        %v756 = vmul.f32 %v552, %v723
        %757 = vadd.xlane.f32.xlu0 %v725
        %v758 = vpop.xlane.xlu0 %757
        %759 = vadd.xlane.f32.xlu0 %v726
        %v760 = vpop.xlane.xlu0 %759
        %761 = vadd.xlane.f32.xlu0 %v727
        %v762 = vpop.xlane.xlu0 %761
        %763 = vadd.xlane.f32.xlu0 %v728
        %v764 = vpop.xlane.xlu0 %763
        %765 = vadd.xlane.f32.xlu0 %v729
        %v766 = vpop.xlane.xlu0 %765
        %767 = vadd.xlane.f32.xlu0 %v730
        %v768 = vpop.xlane.xlu0 %767
        %769 = vadd.xlane.f32.xlu0 %v731
        %v770 = vpop.xlane.xlu0 %769
        %771 = vadd.xlane.f32.xlu0 %v732
        %v772 = vpop.xlane.xlu0 %771
        %773 = vadd.xlane.f32.xlu0 %v733
        %v774 = vpop.xlane.xlu0 %773
        %775 = vadd.xlane.f32.xlu0 %v734
        %v776 = vpop.xlane.xlu0 %775
        %777 = vadd.xlane.f32.xlu0 %v735
        %v778 = vpop.xlane.xlu0 %777
        %779 = vadd.xlane.f32.xlu0 %v736
        %v780 = vpop.xlane.xlu0 %779
        %781 = vadd.xlane.f32.xlu0 %v737
        %v782 = vpop.xlane.xlu0 %781
        %783 = vadd.xlane.f32.xlu0 %v738
        %v784 = vpop.xlane.xlu0 %783
        %785 = vadd.xlane.f32.xlu0 %v739
        %v786 = vpop.xlane.xlu0 %785
        %787 = vadd.xlane.f32.xlu0 %v740
        %v788 = vpop.xlane.xlu0 %787
        %789 = vadd.xlane.f32.xlu0 %v741
        %v790 = vpop.xlane.xlu0 %789
        %791 = vadd.xlane.f32.xlu0 %v742
        %v792 = vpop.xlane.xlu0 %791
        %793 = vadd.xlane.f32.xlu0 %v743
        %v794 = vpop.xlane.xlu0 %793
        %795 = vadd.xlane.f32.xlu0 %v744
        %v796 = vpop.xlane.xlu0 %795
        %797 = vadd.xlane.f32.xlu0 %v745
        %v798 = vpop.xlane.xlu0 %797
        %799 = vadd.xlane.f32.xlu0 %v746
        %v800 = vpop.xlane.xlu0 %799
        %801 = vadd.xlane.f32.xlu0 %v747
        %v802 = vpop.xlane.xlu0 %801
        %803 = vadd.xlane.f32.xlu0 %v748
        %v804 = vpop.xlane.xlu0 %803
        %805 = vadd.xlane.f32.xlu0 %v749
        %v806 = vpop.xlane.xlu0 %805
        %807 = vadd.xlane.f32.xlu0 %v750
        %v808 = vpop.xlane.xlu0 %807
        %809 = vadd.xlane.f32.xlu0 %v751
        %v810 = vpop.xlane.xlu0 %809
        %811 = vadd.xlane.f32.xlu0 %v752
        %v812 = vpop.xlane.xlu0 %811
        %813 = vadd.xlane.f32.xlu0 %v753
        %v814 = vpop.xlane.xlu0 %813
        %815 = vadd.xlane.f32.xlu0 %v754
        %v816 = vpop.xlane.xlu0 %815
        %817 = vadd.xlane.f32.xlu0 %v755
        %v818 = vpop.xlane.xlu0 %817
        %819 = vadd.xlane.f32.xlu0 %v756
        %v820 = vpop.xlane.xlu0 %819
        %821 = vst.msk [vmem:[%s306] sm:$0xff] %vm688, %v758
        %822 = vst.msk [vmem:[%s306 + $0x8] sm:$0xff] %vm688, %v760
        %823 = vst.msk [vmem:[%s306 + $0x10] sm:$0xff] %vm688, %v762
        %824 = vst.msk [vmem:[%s306 + $0x18] sm:$0xff] %vm688, %v764
        %825 = vst.msk [vmem:[%s306 + $0x20] sm:$0xff] %vm688, %v766
        %826 = vst.msk [vmem:[%s306 + $0x28] sm:$0xff] %vm688, %v768
        %827 = vst.msk [vmem:[%s306 + $0x30] sm:$0xff] %vm688, %v770
        %828 = vst.msk [vmem:[%s306 + $0x38] sm:$0xff] %vm688, %v772
        %829 = vst.msk [vmem:[%s306 + $0x40] sm:$0xff] %vm688, %v774
        %830 = vst.msk [vmem:[%s306 + $0x48] sm:$0xff] %vm688, %v776
        %831 = vst.msk [vmem:[%s306 + $0x50] sm:$0xff] %vm688, %v778
        %832 = vst.msk [vmem:[%s306 + $0x58] sm:$0xff] %vm688, %v780
        %833 = vst.msk [vmem:[%s306 + $0x60] sm:$0xff] %vm688, %v782
        %834 = vst.msk [vmem:[%s306 + $0x68] sm:$0xff] %vm688, %v784
        %835 = vst.msk [vmem:[%s306 + $0x70] sm:$0xff] %vm688, %v786
        %836 = vst.msk [vmem:[%s306 + $0x78] sm:$0xff] %vm688, %v788
        %837 = vst.msk [vmem:[%s306 + $0x80] sm:$0xff] %vm688, %v790
        %838 = vst.msk [vmem:[%s306 + $0x88] sm:$0xff] %vm688, %v792
        %839 = vst.msk [vmem:[%s306 + $0x90] sm:$0xff] %vm688, %v794
        %840 = vst.msk [vmem:[%s306 + $0x98] sm:$0xff] %vm688, %v796
        %841 = vst.msk [vmem:[%s306 + $0xa0] sm:$0xff] %vm688, %v798
        %842 = vst.msk [vmem:[%s306 + $0xa8] sm:$0xff] %vm688, %v800
        %843 = vst.msk [vmem:[%s306 + $0xb0] sm:$0xff] %vm688, %v802
        %844 = vst.msk [vmem:[%s306 + $0xb8] sm:$0xff] %vm688, %v804
        %845 = vst.msk [vmem:[%s306 + $0xc0] sm:$0xff] %vm688, %v806
        %846 = vst.msk [vmem:[%s306 + $0xc8] sm:$0xff] %vm688, %v808
        %847 = vst.msk [vmem:[%s306 + $0xd0] sm:$0xff] %vm688, %v810
        %848 = vst.msk [vmem:[%s306 + $0xd8] sm:$0xff] %vm688, %v812
        %849 = vst.msk [vmem:[%s306 + $0xe0] sm:$0xff] %vm688, %v814
        %850 = vst.msk [vmem:[%s306 + $0xe8] sm:$0xff] %vm688, %v816
        %851 = vst.msk [vmem:[%s306 + $0xf0] sm:$0xff] %vm688, %v818
        %852 = vst.msk [vmem:[%s306 + $0xf8] sm:$0xff] %vm688, %v820
        %v853 = vlaneseq
        %v854 = vand.u32 %v853, 127
        %vm855 = vcmp.eq.s32.totalorder %v854, 32
        %v856 = vsel %vm855, 1.0, %v459
        %v857 = vsel %vm855, 1.0, %v462
        %v858 = vsel %vm855, 1.0, %v465
        %v859 = vsel %vm855, 1.0, %v468
        %v860 = vsel %vm855, 1.0, %v471
        %v861 = vsel %vm855, 1.0, %v474
        %v862 = vsel %vm855, 1.0, %v477
        %v863 = vsel %vm855, 1.0, %v480
        %v864 = vsel %vm855, 1.0, %v483
        %v865 = vsel %vm855, 1.0, %v486
        %v866 = vsel %vm855, 1.0, %v489
        %v867 = vsel %vm855, 1.0, %v492
        %v868 = vsel %vm855, 1.0, %v495
        %v869 = vsel %vm855, 1.0, %v498
        %v870 = vsel %vm855, 1.0, %v501
        %v871 = vsel %vm855, 1.0, %v504
        %v872 = vsel %vm855, 1.0, %v507
        %v873 = vsel %vm855, 1.0, %v510
        %v874 = vsel %vm855, 1.0, %v513
        %v875 = vsel %vm855, 1.0, %v516
        %v876 = vsel %vm855, 1.0, %v519
        %v877 = vsel %vm855, 1.0, %v522
        %v878 = vsel %vm855, 1.0, %v525
        %v879 = vsel %vm855, 1.0, %v528
        %v880 = vsel %vm855, 1.0, %v531
        %v881 = vsel %vm855, 1.0, %v534
        %v882 = vsel %vm855, 1.0, %v537
        %v883 = vsel %vm855, 1.0, %v540
        %v884 = vsel %vm855, 1.0, %v543
        %v885 = vsel %vm855, 1.0, %v546
        %v886 = vsel %vm855, 1.0, %v549
        %v887 = vsel %vm855, 1.0, %v552
        %v888 = vpack.c.bf16 %v856, %v856
        %v889 = vpack.c.bf16 %v857, %v857
        %v890 = vpack.c.bf16 %v858, %v858
        %v891 = vpack.c.bf16 %v859, %v859
        %v892 = vpack.c.bf16 %v860, %v860
        %v893 = vpack.c.bf16 %v861, %v861
        %v894 = vpack.c.bf16 %v862, %v862
        %v895 = vpack.c.bf16 %v863, %v863
        %v896 = vpack.c.bf16 %v864, %v864
        %v897 = vpack.c.bf16 %v865, %v865
        %v898 = vpack.c.bf16 %v866, %v866
        %v899 = vpack.c.bf16 %v867, %v867
        %v900 = vpack.c.bf16 %v868, %v868
        %v901 = vpack.c.bf16 %v869, %v869
        %v902 = vpack.c.bf16 %v870, %v870
        %v903 = vpack.c.bf16 %v871, %v871
        %v904 = vpack.c.bf16 %v872, %v872
        %v905 = vpack.c.bf16 %v873, %v873
        %v906 = vpack.c.bf16 %v874, %v874
        %v907 = vpack.c.bf16 %v875, %v875
        %v908 = vpack.c.bf16 %v876, %v876
        %v909 = vpack.c.bf16 %v877, %v877
        %v910 = vpack.c.bf16 %v878, %v878
        %v911 = vpack.c.bf16 %v879, %v879
        %v912 = vpack.c.bf16 %v880, %v880
        %v913 = vpack.c.bf16 %v881, %v881
        %v914 = vpack.c.bf16 %v882, %v882
        %v915 = vpack.c.bf16 %v883, %v883
        %v916 = vpack.c.bf16 %v884, %v884
        %v917 = vpack.c.bf16 %v885, %v885
        %v918 = vpack.c.bf16 %v886, %v886
        %v919 = vpack.c.bf16 %v887, %v887
        %920 = vst [vmem:[%s274] sm:$0xf] %v888
        %921 = vst [vmem:[%s274 + $0x4] sm:$0xf] %v889
        %922 = vst [vmem:[%s274 + $0x8] sm:$0xf] %v890
        %923 = vst [vmem:[%s274 + $0xc] sm:$0xf] %v891
        %924 = vst [vmem:[%s274 + $0x10] sm:$0xf] %v892
        %925 = vst [vmem:[%s274 + $0x14] sm:$0xf] %v893
        %926 = vst [vmem:[%s274 + $0x18] sm:$0xf] %v894
        %927 = vst [vmem:[%s274 + $0x1c] sm:$0xf] %v895
        %928 = vst [vmem:[%s274 + $0x20] sm:$0xf] %v896
        %929 = vst [vmem:[%s274 + $0x24] sm:$0xf] %v897
        %930 = vst [vmem:[%s274 + $0x28] sm:$0xf] %v898
        %931 = vst [vmem:[%s274 + $0x2c] sm:$0xf] %v899
        %932 = vst [vmem:[%s274 + $0x30] sm:$0xf] %v900
        %933 = vst [vmem:[%s274 + $0x34] sm:$0xf] %v901
        %934 = vst [vmem:[%s274 + $0x38] sm:$0xf] %v902
        %935 = vst [vmem:[%s274 + $0x3c] sm:$0xf] %v903
        %936 = vst [vmem:[%s274 + $0x40] sm:$0xf] %v904
        %937 = vst [vmem:[%s274 + $0x44] sm:$0xf] %v905
        %938 = vst [vmem:[%s274 + $0x48] sm:$0xf] %v906
        %939 = vst [vmem:[%s274 + $0x4c] sm:$0xf] %v907
        %940 = vst [vmem:[%s274 + $0x50] sm:$0xf] %v908
        %941 = vst [vmem:[%s274 + $0x54] sm:$0xf] %v909
        %942 = vst [vmem:[%s274 + $0x58] sm:$0xf] %v910
        %943 = vst [vmem:[%s274 + $0x5c] sm:$0xf] %v911
        %944 = vst [vmem:[%s274 + $0x60] sm:$0xf] %v912
        %945 = vst [vmem:[%s274 + $0x64] sm:$0xf] %v913
        %946 = vst [vmem:[%s274 + $0x68] sm:$0xf] %v914
        %947 = vst [vmem:[%s274 + $0x6c] sm:$0xf] %v915
        %948 = vst [vmem:[%s274 + $0x70] sm:$0xf] %v916
        %949 = vst [vmem:[%s274 + $0x74] sm:$0xf] %v917
        %950 = vst [vmem:[%s274 + $0x78] sm:$0xf] %v918
        %951 = vst [vmem:[%s274 + $0x7c] sm:$0xf] %v919
        %s952 = sand.u32 %s141, 1
        %s953 = scalar_lea.sflag [#allocation4], %s952
        %s954 = sand.u32 %s141, 1
        %s955 = smul.addr %s954, 128
        %s956 = scalar_lea.vmem [#allocation3], %s955
        %s957 = smul.u32 32, %s23
        %p958 = scmp.lt.s32.totalorder %s957, 127
        %s959 = scalar_select %p958, %s957, 127
        %s960 = smul.addr %s959, 8
        %s961 = scalar_lea.vmem %s6, %s960
        %s962 = smul.u32 32, %s23
        %p963 = scmp.lt.s32.totalorder %s962, 127
        %s964 = scalar_select %p963, %s962, 127
        %s965 = smul.addr %s964, 8
        %s966 = scalar_lea.vmem %s7, %s965
        // Predicated region
        $region41: #{tpu_custom_call.1} parent=39 // pred_check
          %p967 = pneg %p151
        $region42: #{tpu_custom_call.1} parent=39 // pred_check_branch
          %969 = sbr.rel (%p967) target = $region44
        $region43: #{tpu_custom_call.1} parent=39 // pred_region
          %s970 = smul.u32 32, %s23
          %972 = vsyncadd %s953, 0
          %s973 = smul.addr %s970, 4
          %s974 = scalar_lea.hbm %s5, %s973
          %s975 = sshll.u32 %s956, 4
          %s976 = int_to_ptr.vmem [resolvable:$true] %s975
          %s977 = sshll.u32 %s974, 4
          %s978 = int_to_ptr.hbm [resolvable:$true] %s977
          %983 = dma.vmem_to_hbm [thread:$0]  %s976, 2048, %s978, %s953, 64, 64, 4
        $region44: #{tpu_custom_call.1} parent=39 // pred_fallthru
          _
        // Predicated region
        $region45: #{tpu_custom_call.1} parent=39 // pred_check
          %p984 = pneg %p177
        $region46: #{tpu_custom_call.1} parent=39 // pred_check_branch
          %986 = sbr.rel (%p984) target = $region48
        $region47: #{tpu_custom_call.1} parent=39 // pred_region
          %s987 = smul.u32 32, %s23
        $region48: #{tpu_custom_call.1} parent=39 // pred_fallthru
          _
        // Predicated region
        $region49: #{tpu_custom_call.1} parent=39 // pred_check
          %p988 = pneg %p203
        $region50: #{tpu_custom_call.1} parent=39 // pred_check_branch
          %990 = sbr.rel (%p988) target = $region52
        $region51: #{tpu_custom_call.1} parent=39 // pred_region
          %s991 = smul.u32 32, %s23
        $region52: #{tpu_custom_call.1} parent=39 // pred_fallthru
          _
      $region40: #{tpu_custom_call.1} parent=5 // pred_fallthru
        _
      %p992 = scmp.le.s32.totalorder 2, %s18
      // Predicated region
      $region53: #{tpu_custom_call.1} parent=5 // pred_check
        %p993 = pneg %p992
      $region54: #{tpu_custom_call.1} parent=5 // pred_check_branch
        %995 = sbr.rel (%p993) target = $region56
      $region55: #{tpu_custom_call.1} parent=5 // pred_region
        %s996 = ssub.s32 %s18, 2
        // Predicated region
        $region57: #{tpu_custom_call.1} parent=55 // pred_check
          %p997 = pneg %p157
        $region58: #{tpu_custom_call.1} parent=55 // pred_check_branch
          %999 = sbr.rel (%p997) target = $region60
        $region59: #{tpu_custom_call.1} parent=55 // pred_region
          %s1000 = sand.u32 %s142, 1
          %s1001 = scalar_lea.sflag [#allocation4], %s1000
          %s1002 = sand.u32 %s142, 1
          %s1003 = smul.addr %s1002, 128
          %s1004 = scalar_lea.vmem [#allocation3], %s1003
          %1006 = dma.done %s1001, 2048
        $region60: #{tpu_custom_call.1} parent=55 // pred_fallthru
          _
        // Predicated region
        $region61: #{tpu_custom_call.1} parent=55 // pred_check
          %p1007 = pneg %p183
        $region62: #{tpu_custom_call.1} parent=55 // pred_check_branch
          %1009 = sbr.rel (%p1007) target = $region64
        $region63: #{tpu_custom_call.1} parent=55 // pred_region
          %s1010 = smul.u32 32, %s24
          %p1011 = scmp.lt.s32.totalorder %s1010, 127
          %s1012 = scalar_select %p1011, %s1010, 127
          %s1013 = smul.addr %s1012, 8
          %s1014 = scalar_lea.vmem %s6, %s1013
        $region64: #{tpu_custom_call.1} parent=55 // pred_fallthru
          _
        // Predicated region
        $region65: #{tpu_custom_call.1} parent=55 // pred_check
          %p1015 = pneg %p209
        $region66: #{tpu_custom_call.1} parent=55 // pred_check_branch
          %1017 = sbr.rel (%p1015) target = $region68
        $region67: #{tpu_custom_call.1} parent=55 // pred_region
          %s1018 = smul.u32 32, %s24
          %p1019 = scmp.lt.s32.totalorder %s1018, 127
          %s1020 = scalar_select %p1019, %s1018, 127
          %s1021 = smul.addr %s1020, 8
          %s1022 = scalar_lea.vmem %s7, %s1021
        $region68: #{tpu_custom_call.1} parent=55 // pred_fallthru
          _
      $region56: #{tpu_custom_call.1} parent=5 // pred_fallthru
        _
    $region6: #{tpu_custom_call.1} parent=1 // loop_footer
      %s22 = sadd.s32 1, %s18
    $region7: #{tpu_custom_call.1} parent=1 // loop_footer_branch
      %17 = sbr.rel target = $region3
    $region8: #{tpu_custom_call.1} parent=1 // loop_exit
      _
    %1023 = vsyncpa [#allocation4], 1
    %s1024 = scalar_lea.sflag [#allocation4], 1
    %1025 = vsyncpa %s1024, 1

</llo_original>
